<compile_context>
chip_gen: v5e
topology: v5e:2x2
jax: 0.10.0
libtpu: 0.0.40
codegen_flags: <defaults>
</compile_context>

<pallas_src>
import functools

import jax
import jax.numpy as jnp
from jax.experimental import pallas as pl
from jax.experimental.pallas import tpu as pltpu

EPS = 1e-07


def _contrast_loss_kernel(x_ref, o_ref, *, m, pn, true_b, block_rows):
    i = pl.program_id(0)

    @pl.when(i == 0)
    def _init():
        o_ref[...] = jnp.zeros_like(o_ref)

    x = x_ref[...].astype(jnp.float32)
    tb, k1 = x.shape
    c = jnp.float32(m * pn + EPS)
    m_pn = jnp.float32(m * pn)

    col = jax.lax.broadcasted_iota(jnp.int32, (tb, k1), 1)
    row = jax.lax.broadcasted_iota(jnp.int32, (tb, k1), 0) + i * block_rows

    # column 0 (positive):  log( P_pos / (P_pos + m*Pn + eps) )
    # columns 1..m (neg):   log( m*Pn  / (P_neg + m*Pn + eps) )
    num = jnp.where(col == 0, x, m_pn)
    contrib = jnp.log(num / (x + c))
    # mask out padded rows
    contrib = jnp.where(row < true_b, contrib, jnp.float32(0.0))

    o_ref[...] = o_ref[...] + jnp.sum(contrib)

    @pl.when(i == pl.num_programs(0) - 1)
    def _finalize():
        o_ref[...] = -o_ref[...] / jnp.float32(true_b)


def contrast_loss(x: jax.Array, n_data: int, block_rows: int | None = None) -> jax.Array:
    """Pallas TPU forward pass of CRD ContrastLoss. Returns shape (1,) float32."""
    if x.ndim == 3 and x.shape[-1] == 1:
        x = x[..., 0]
    assert x.ndim == 2, "expected (bsz, K+1) scores"
    B, K1 = x.shape
    assert K1 >= 2, "need at least one negative"
    m = K1 - 1
    pn = 1.0 / float(n_data)

    def _round_up(v, mult):
        return ((v + mult - 1) // mult) * mult

    if block_rows is None:
        # target ~2 MiB f32 row tiles, multiple of 8, capped at 1024 and at the
        # (rounded-up) batch size so small batches are a single tile.
        target_bytes = 2 * 1024 * 1024
        br = max(1, target_bytes // (4 * K1))
        br = min(int(br), 1024, _round_up(B, 8))
        br = max(8, (br // 8) * 8)
    else:
        br = int(block_rows)
        assert br % 8 == 0, "block_rows must be a multiple of 8"

    padded_B = _round_up(B, br)
    if padded_B != B:
        # pad with 1.0: produces finite (masked-out) log contributions
        x = jnp.pad(x, ((0, padded_B - B), (0, 0)), constant_values=1.0)

    grid = (padded_B // br,)
    kernel = functools.partial(
        _contrast_loss_kernel, m=m, pn=pn, true_b=B, block_rows=br
    )

    n_elems = padded_B * K1
    cost = pl.CostEstimate(
        flops=5 * n_elems,
        transcendentals=n_elems,
        bytes_accessed=n_elems * x.dtype.itemsize + 4,
    )

    out = pl.pallas_call(
        kernel,
        out_shape=jax.ShapeDtypeStruct((1, 1), jnp.float32),
        grid_spec=pltpu.PrefetchScalarGridSpec(
            num_scalar_prefetch=0,
            grid=grid,
            in_specs=[pl.BlockSpec((br, K1), lambda i: (i, 0))],
            out_specs=pl.BlockSpec((1, 1), lambda i: (0, 0)),
        ),
        compiler_params=pltpu.CompilerParams(
            dimension_semantics=("arbitrary",),  # reduction axis
        ),
        cost_estimate=cost,
    )(x)
    return out.reshape((1,))


def _reference(x, n_data):
    x = x.astype(jnp.float32)
    if x.ndim == 3 and x.shape[-1] == 1:
        x = x[..., 0]
    bsz, k1 = x.shape
    m = k1 - 1
    pn = 1.0 / float(n_data)
    p_pos = x[:, 0]
    log_d1 = jnp.log(p_pos / (p_pos + m * pn + EPS))
    p_neg = x[:, 1:]
    log_d0 = jnp.log((m * pn) / (p_neg + m * pn + EPS))
    return (-(jnp.sum(log_d1) + jnp.sum(log_d0)) / bsz).reshape((1,))


if __name__ == "__main__":
    key = jax.random.PRNGKey(0)
    n_data = 100

    # Case 1: small CRD-like scores, batch=8, K=16 negatives -> x (8, 17)
    k1, k2 = jax.random.split(key)
    x1 = jax.random.uniform(k1, (8, 17), dtype=jnp.float32, minval=0.01, maxval=1.0)
    out1 = jax.block_until_ready(contrast_loss(x1, n_data))
    ref1 = _reference(x1, n_data)
    assert out1.shape == (1,)
    assert jnp.allclose(out1, ref1, atol=1e-4, rtol=1e-5), (out1, ref1)

    # Case 2: batch not a multiple of the row tile (exercises padding + masking),
    #         with the trailing singleton dim as produced by ContrastMemory.
    x2 = jax.random.uniform(k2, (20, 33, 1), dtype=jnp.float32, minval=0.01, maxval=1.0)
    out2 = jax.block_until_ready(contrast_loss(x2, n_data, block_rows=8))
    ref2 = _reference(x2, n_data)
    assert jnp.allclose(out2, ref2, atol=1e-4, rtol=1e-5), (out2, ref2)

    print("KERNEL_OK")
</pallas_src>

<mosaic_0001>
module attributes {stable_mosaic.version = 11 : i64} {
  func.func @_contrast_loss_kernel(%arg0: i32, %arg1: memref<8x17xf32, #tpu.memory_space<vmem>>, %arg2: memref<1x1xf32, #tpu.memory_space<vmem>>) attributes {dimension_semantics = [#tpu.dimension_semantics<arbitrary>], iteration_bounds = array<i64: 1>, scalar_prefetch = 0 : i64, scratch_operands = 0 : i64, tpu.core_type = #tpu.core_type<tc>, window_params = [{transform_indices = @transform_0, window_bounds = array<i64: 8, 17>}, {pipeline_mode = #tpu.pipeline_mode<synchronous>, transform_indices = @transform_1, window_bounds = array<i64: 1, 1>}]} {
    %c0_i32 = arith.constant 0 : i32
    %0 = arith.cmpi eq, %arg0, %c0_i32 : i32
    %1 = arith.extui %0 : i1 to i32
    %c0_i32_0 = arith.constant 0 : i32
    %2 = arith.cmpi ne, %1, %c0_i32_0 : i32
    scf.if %2 {
      %cst_13 = arith.constant 0.000000e+00 : f32
      %32 = vector.broadcast %cst_13 : f32 to vector<1x1xf32>
      %c0_14 = arith.constant 0 : index
      %c0_15 = arith.constant 0 : index
      %33 = vector.load %arg2[%c0_14, %c0_15] : memref<1x1xf32, #tpu.memory_space<vmem>>, vector<1x1xf32>
      tpu.vector_store %arg2[%c0_14, %c0_15], %32 {strides = array<i32>} : memref<1x1xf32, #tpu.memory_space<vmem>>, vector<1x1xf32>,
    } else {
    }
    %c0 = arith.constant 0 : index
    %c0_1 = arith.constant 0 : index
    %3 = vector.load %arg1[%c0, %c0_1] : memref<8x17xf32, #tpu.memory_space<vmem>>, vector<8x17xf32>
    %4 = tpu.iota {dimensions = array<i32: 1>} : vector<8x17xi32>
    %5 = tpu.iota {dimensions = array<i32: 0>} : vector<8x17xi32>
    %c8_i32 = arith.constant 8 : i32
    %6 = arith.muli %arg0, %c8_i32 : i32
    %7 = vector.broadcast %6 : i32 to vector<8x17xi32>
    %8 = arith.addi %5, %7 : vector<8x17xi32>
    %c0_i32_2 = arith.constant 0 : i32
    %9 = vector.broadcast %c0_i32_2 : i32 to vector<8x17xi32>
    %10 = arith.cmpi eq, %4, %9 : vector<8x17xi32>
    %cst = arith.constant 1.600000e-01 : f32
    %11 = vector.broadcast %cst : f32 to vector<8x17xf32>
    %12 = arith.select %10, %3, %11 : vector<8x17xi1>, vector<8x17xf32>
    %cst_3 = arith.constant 0.160000101 : f32
    %13 = vector.broadcast %cst_3 : f32 to vector<8x17xf32>
    %14 = arith.addf %3, %13 : vector<8x17xf32>
    %15 = arith.divf %12, %14 : vector<8x17xf32>
    %16 = math.log %15 : vector<8x17xf32>
    %c8_i32_4 = arith.constant 8 : i32
    %17 = vector.broadcast %c8_i32_4 : i32 to vector<8x17xi32>
    %18 = arith.cmpi slt, %8, %17 : vector<8x17xi32>
    %cst_5 = arith.constant 0.000000e+00 : f32
    %19 = vector.broadcast %cst_5 : f32 to vector<8x17xf32>
    %20 = arith.select %18, %16, %19 : vector<8x17xi1>, vector<8x17xf32>
    %c0_6 = arith.constant 0 : index
    %c0_7 = arith.constant 0 : index
    %21 = vector.load %arg2[%c0_6, %c0_7] : memref<1x1xf32, #tpu.memory_space<vmem>>, vector<1x1xf32>
    %22 = vector.shape_cast %20 : vector<8x17xf32> to vector<1x8x17xf32>
    %cst_8 = arith.constant dense<0.000000e+00> : vector<1xf32>
    %23 = vector.multi_reduction <add>, %22, %cst_8 [1, 2] : vector<1x8x17xf32> to vector<1xf32>
    %24 = vector.shape_cast %23 : vector<1xf32> to vector<1x1x1xf32>
    %25 = vector.extract %24[0, 0, 0] : f32 from vector<1x1x1xf32>
    %26 = vector.broadcast %25 : f32 to vector<1x1xf32>
    %27 = arith.addf %21, %26 : vector<1x1xf32>
    %c0_9 = arith.constant 0 : index
    %c0_10 = arith.constant 0 : index
    %28 = vector.load %arg2[%c0_9, %c0_10] : memref<1x1xf32, #tpu.memory_space<vmem>>, vector<1x1xf32>
    tpu.vector_store %arg2[%c0_9, %c0_10], %27 {strides = array<i32>} : memref<1x1xf32, #tpu.memory_space<vmem>>, vector<1x1xf32>,
    %c0_i32_11 = arith.constant 0 : i32
    %29 = arith.cmpi eq, %arg0, %c0_i32_11 : i32
    %30 = arith.extui %29 : i1 to i32
    %c0_i32_12 = arith.constant 0 : i32
    %31 = arith.cmpi ne, %30, %c0_i32_12 : i32
    scf.if %31 {
      %c0_13 = arith.constant 0 : index
      %c0_14 = arith.constant 0 : index
      %32 = vector.load %arg2[%c0_13, %c0_14] : memref<1x1xf32, #tpu.memory_space<vmem>>, vector<1x1xf32>
      %cst_15 = arith.constant 0.000000e+00 : f32
      %33 = vector.broadcast %cst_15 : f32 to vector<1x1xf32>
      %34 = arith.subf %33, %32 : vector<1x1xf32>
      %cst_16 = arith.constant 8.000000e+00 : f32
      %35 = vector.broadcast %cst_16 : f32 to vector<1x1xf32>
      %36 = arith.divf %34, %35 : vector<1x1xf32>
      %c0_17 = arith.constant 0 : index
      %c0_18 = arith.constant 0 : index
      %37 = vector.load %arg2[%c0_17, %c0_18] : memref<1x1xf32, #tpu.memory_space<vmem>>, vector<1x1xf32>
      tpu.vector_store %arg2[%c0_17, %c0_18], %36 {strides = array<i32>} : memref<1x1xf32, #tpu.memory_space<vmem>>, vector<1x1xf32>,
    } else {
    }
    return
  }
  func.func @transform_0(%arg0: i32) -> (i32, i32) {
    %c0_i32 = arith.constant 0 : i32
    %c0_i32_0 = arith.constant 0 : i32
    return %arg0, %c0_i32 : i32, i32
  }
  func.func @transform_1(%arg0: i32) -> (i32, i32) {
    %c0_i32 = arith.constant 0 : i32
    %c0_i32_0 = arith.constant 0 : i32
    %c0_i32_1 = arith.constant 0 : i32
    return %c0_i32, %c0_i32_0 : i32, i32
  }
}

</mosaic_0001>

<llo_original>
// kernel: tpu_custom_call.1
$region0: #{tpu_custom_call.1}
  #allocation0 [shape = 'u32[]', space=smem, size = 0x4, offset = 0x4, fixed_abs, tag = 'smem constant byte address 0x4 - core index']
  #allocation1 [shape = 'u32[72,128]{1,0:T(1,128)}', space=vmem, size = 0x9000, scoped, tag = 'internal scratch']
  %s0 = inlined_call_operand.hbm [shape: f32[8,17], index: 0, kind: input, shape index: {}]
  %s1 = inlined_call_operand.hbm [shape: f32[1,1], index: 1, kind: output, shape index: {}]
  %s2 = sld [smem:[#allocation0]]
  $region26: #{tpu_custom_call.1} parent=0
    _
  %s4 = ssub.s32 1, %s2
  %s5 = scalar_select 0, %s4, %s2
  $region1: #{tpu_custom_call.1} parent=0
    #allocation2 [shape = 'u8[4096]{0}', space=vmem, size = 0x1000, scoped, tag = 'input window, operand 0, single buffered']
    #allocation3 [shape = 's32[1]{0}', space=sflag, size = 0x4, scoped, tag = 'scoped memory for tpu_custom_call.1']
    #allocation4 [shape = 's32[1]{0}', space=sflag, size = 0x4, scoped, tag = 'scoped memory for tpu_custom_call.1']
    #allocation5 [shape = 'u8[512]{0}', space=vmem, size = 0x400, scoped, tag = 'output window, operand 0, single buffered']
    %6 = vsyncpa [#allocation3], 0
    %7 = vsyncpa [#allocation4], 0
    // Predicated region
    $region2: #{tpu_custom_call.1} parent=1 // pred_check
      _
    $region3: #{tpu_custom_call.1} parent=1 // pred_check_branch
      %9 = sbr.rel (0) target = $region5
    $region4: #{tpu_custom_call.1} parent=1 // pred_region
      %11 = vsyncadd [#allocation3], 0
      %s13 = sshll.u32 %s0, 4
      %s14 = int_to_ptr.hbm [resolvable:$true] %s13
      %s15 = sshll.u32 [#allocation2], 4
      %s16 = int_to_ptr.vmem [resolvable:$true] %s15
      %18 = dma.hbm_to_vmem [thread:$0]  %s14, 128, %s16, [#allocation3]
    $region5: #{tpu_custom_call.1} parent=1 // pred_fallthru
      _
    // Predicated region
    $region6: #{tpu_custom_call.1} parent=1 // pred_check
      _
    $region7: #{tpu_custom_call.1} parent=1 // pred_check_branch
      %20 = sbr.rel (0) target = $region9
    $region8: #{tpu_custom_call.1} parent=1 // pred_region
      %22 = dma.done [#allocation3], 128
    $region9: #{tpu_custom_call.1} parent=1 // pred_fallthru
      _
    %p23 = scmp.eq.s32.totalorder 0, 0
    // Predicated region
    $region10: #{tpu_custom_call.1} parent=1 // pred_check
      %p24 = pneg %p23
    $region11: #{tpu_custom_call.1} parent=1 // pred_check_branch
      %26 = sbr.rel (%p24) target = $region13
    $region12: #{tpu_custom_call.1} parent=1 // pred_region
      %vm27 = vcmask 0
      %28 = vst.msk [vmem:[#allocation5] sm:$0x1] %vm27, 0.0
    $region13: #{tpu_custom_call.1} parent=1 // pred_fallthru
      _
    %v29 = vld [vmem:[#allocation2] sm:$0xff]
    %v30 = vlaneseq
    %v31 = vand.u32 %v30, 127
    %v32 = vlaneseq
    %v33 = vshrl.u32 %v32, 7
    %s34 = smul.u32 0, 8
    %v35 = vstv %s34
    %v36 = vadd.s32 %v33, %v35
    %vm37 = vcmp.eq.s32.totalorder %v31, 0
    %v38 = vsel %vm37, %v29, 0.16
    %v39 = vadd.f32 %v29, 0.1600001
    %v40 = vrcp.pop %v39
    %v41 = vmul.f32 %v39, %v40
    %v42 = vsub.f32 1.0, %v41
    %v43 = vmul.f32 %v40, %v42
    %v44 = vadd.f32 %v40, %v43
    %vm45 = vweird.f32 %v39
    %vm46 = vweird.f32 %v40
    %vm47 = vmor %vm45, %vm46
    %v48 = vsel %vm47, %v40, %v44
    %v49 = vand.u32 2147483647, %v39
    %vm50 = vcmp.eq.f32.partialorder %v49, 8.507059e+37
    %v51 = vand.u32 %v39, 2147483648
    %v52 = vor.u32 1.1754944e-38, %v51
    %v53 = vsel %vm50, %v52, %v48
    %v54 = vmul.f32 %v38, %v53
    %v55 = vlog2.pop %v54
    %v56 = vmul.f32 %v55, 0.6931472
    %vm57 = vcmp.lt.s32.totalorder %v36, 8
    %v58 = vsel %vm57, %v56, 0.0
    %v59 = vld [vmem:[#allocation5] sm:$0x1]
    %vm60 = vcmask 138240
    %v61 = vsel %vm60, %v58, 0.0
    %62 = vadd.xlane.f32.xlu0 %v61
    %v63 = vpop.xlane.xlu0 %62
    %v64 = vrot.slane %v63, 4
    %v65 = vadd.f32 %v63, %v64
    %v66 = vrot.slane %v65, 2
    %v67 = vadd.f32 %v65, %v66
    %v68 = vrot.slane %v67, 1
    %v69 = vadd.f32 %v67, %v68
    %s70 = vtos %v69
    %v71 = vstv %s70
    %v72 = vadd.f32 %v59, %v71
    %vm73 = vcmask 0
    %74 = vst.msk [vmem:[#allocation5] sm:$0x1] %vm73, %v72
    // Predicated region
    $region14: #{tpu_custom_call.1} parent=1 // pred_check
      %p75 = pneg %p23
    $region15: #{tpu_custom_call.1} parent=1 // pred_check_branch
      %77 = sbr.rel (%p75) target = $region17
    $region16: #{tpu_custom_call.1} parent=1 // pred_region
      %v78 = vld [vmem:[#allocation5] sm:$0x1]
      %v79 = vsub.f32 0.0, %v78
      %v80 = vrcp.pop 8.0
      %v81 = vmul.f32 8.0, %v80
      %v82 = vsub.f32 1.0, %v81
      %v83 = vmul.f32 %v80, %v82
      %v84 = vadd.f32 %v80, %v83
      %vm85 = vweird.f32 %v80
      %v86 = vsel %vm85, %v80, %v84
      %v87 = vmul.f32 %v79, %v86
      %88 = vst.msk [vmem:[#allocation5] sm:$0x1] %vm73, %v87
    $region17: #{tpu_custom_call.1} parent=1 // pred_fallthru
      _
    // Predicated region
    $region18: #{tpu_custom_call.1} parent=1 // pred_check
      _
    $region19: #{tpu_custom_call.1} parent=1 // pred_check_branch
      %90 = sbr.rel (0) target = $region21
    $region20: #{tpu_custom_call.1} parent=1 // pred_region
      %92 = vsyncadd [#allocation4], 0
      %s94 = sshll.u32 [#allocation5], 4
      %s95 = int_to_ptr.vmem [resolvable:$true] %s94
      %s96 = sshll.u32 %s1, 4
      %s97 = int_to_ptr.hbm [resolvable:$true] %s96
      %99 = dma.vmem_to_hbm [thread:$0]  %s95, 16, %s97, [#allocation4]
    $region21: #{tpu_custom_call.1} parent=1 // pred_fallthru
      _
    // Predicated region
    $region22: #{tpu_custom_call.1} parent=1 // pred_check
      _
    $region23: #{tpu_custom_call.1} parent=1 // pred_check_branch
      %101 = sbr.rel (0) target = $region25
    $region24: #{tpu_custom_call.1} parent=1 // pred_region
      %103 = dma.done [#allocation4], 16
    $region25: #{tpu_custom_call.1} parent=1 // pred_fallthru
      _
    %104 = vsyncpa [#allocation3], 1
    %105 = vsyncpa [#allocation4], 1

</llo_original>
